<compile_context>
chip_gen: v5e
topology: v5e:2x2
jax: 0.10.0
libtpu: 0.0.40
codegen_flags: <defaults>
</compile_context>

<pallas_src>
import functools

import jax
import jax.numpy as jnp
import numpy as np
from jax import lax
from jax.experimental import pallas as pl
from jax.experimental.pallas import tpu as pltpu


def _round_up(v: int, m: int) -> int:
    return ((v + m - 1) // m) * m


def _spc_measure_kernel(x_ref, h_ref, y_ref, pmax_ref, *,
                        row_tile: int, total_rows: int, padded: bool):
    """Pass 1: per row-tile measurements + partial max of the reconstruction.

    x_ref   : (row_tile, MN) f32   flattened image rows (B*L folded)
    h_ref   : (S, MN)        bf16  measurement matrix (constant block)
    y_ref   : (row_tile, S)  f32   y^T tile (measurements)
    pmax_ref: (8, 128)       f32   tile-wide max of the un-normalized recon
    """
    Xb = x_ref[...].astype(jnp.bfloat16)                      # (row_tile, MN)
    Hb = h_ref[...]                                           # (S, MN) bf16

    # y^T = X @ H^T  (contract over MN), f32 accumulation on the MXU.
    yt = lax.dot_general(Xb, Hb, (((1,), (1,)), ((), ())),
                         preferred_element_type=jnp.float32)  # (row_tile, S)
    y_ref[...] = yt

    # Un-normalized reconstruction, computed here ONLY to get the global max
    # (it is cheaply recomputed in pass 2 instead of round-tripping HBM).
    xh = jnp.dot(yt.astype(jnp.bfloat16), Hb,
                 preferred_element_type=jnp.float32)          # (row_tile, MN)

    if padded:
        # Exclude zero-padded rows from the max (they could wrongly win if all
        # real values are negative).
        row0 = pl.program_id(0) * row_tile
        rid = row0 + lax.broadcasted_iota(jnp.int32, xh.shape, 0)
        xh = jnp.where(rid < total_rows, xh, -jnp.inf)

    pmax_ref[...] = jnp.full(pmax_ref.shape, jnp.max(xh), dtype=pmax_ref.dtype)


def _spc_recon_kernel(inv_ref, y_ref, h_ref, out_ref):
    """Pass 2: recompute reconstruction from y and scale by 1/global_max.

    inv_ref : (1, 1)         f32   precomputed reciprocal of the global max
    y_ref   : (row_tile, S)  f32   y^T tile
    h_ref   : (S, MN)        bf16  measurement matrix (constant block)
    out_ref : (row_tile, MN) f32   normalized reconstruction rows
    """
    yt = y_ref[...].astype(jnp.bfloat16)                      # (row_tile, S)
    xh = jnp.dot(yt, h_ref[...],
                 preferred_element_type=jnp.float32)          # (row_tile, MN)
    out_ref[...] = xh * inv_ref[0, 0]


def spc_forward(x, H, *, row_tile: int = 128):
    """x: (B, L, M, N) f32, H: (S, M*N) f32 -> (y (B,S,L), x_hat (B,L,M,N))."""
    B, L, M, N = x.shape
    S, MN = H.shape
    assert MN == M * N, "H columns must equal M*N"

    R = B * L
    rt = min(row_tile, _round_up(R, 8))           # 128 rows, or tiny-case tile
    R_pad = _round_up(R, rt)
    num_tiles = R_pad // rt
    padded = R_pad != R

    x_flat = x.reshape(R, MN).astype(jnp.float32)
    if padded:
        x_flat = jnp.pad(x_flat, ((0, R_pad - R), (0, 0)))
    H_bf = H.astype(jnp.bfloat16)                 # MXU-native, halves H's VMEM

    cparams = pltpu.CompilerParams(
        dimension_semantics=("parallel",),        # no serial accumulator left
        vmem_limit_bytes=32 * 1024 * 1024,
    )

    kern1 = functools.partial(_spc_measure_kernel,
                              row_tile=rt, total_rows=R, padded=padded)
    y_pad, pmax = pl.pallas_call(
        kern1,
        out_shape=(
            jax.ShapeDtypeStruct((R_pad, S), jnp.float32),
            jax.ShapeDtypeStruct((num_tiles * 8, 128), jnp.float32),
        ),
        grid_spec=pltpu.PrefetchScalarGridSpec(
            num_scalar_prefetch=0,
            grid=(num_tiles,),
            in_specs=[
                pl.BlockSpec((rt, MN), lambda i: (i, 0)),
                pl.BlockSpec((S, MN), lambda i: (0, 0)),   # constant block: no re-DMA
            ],
            out_specs=[
                pl.BlockSpec((rt, S), lambda i: (i, 0)),
                pl.BlockSpec((8, 128), lambda i: (i, 0)),
            ],
        ),
        compiler_params=cparams,
    )(x_flat, H_bf)

    # Tiny XLA reduction + reciprocal-once (multiply in-kernel, never divide).
    gmax = jnp.max(pmax)
    inv_gmax = (1.0 / gmax).reshape(1, 1).astype(jnp.float32)

    x_hat_pad = pl.pallas_call(
        _spc_recon_kernel,
        out_shape=jax.ShapeDtypeStruct((R_pad, MN), jnp.float32),
        grid_spec=pltpu.PrefetchScalarGridSpec(
            num_scalar_prefetch=0,
            grid=(num_tiles,),
            in_specs=[
                pl.BlockSpec((1, 1), lambda i: (0, 0)),
                pl.BlockSpec((rt, S), lambda i: (i, 0)),
                pl.BlockSpec((S, MN), lambda i: (0, 0)),
            ],
            out_specs=pl.BlockSpec((rt, MN), lambda i: (i, 0)),
        ),
        compiler_params=cparams,
    )(inv_gmax, y_pad, H_bf)

    # Small relayouts: y is the small tensor, so this transpose is cheap.
    y = y_pad[:R].reshape(B, L, S).transpose(0, 2, 1)      # (B, S, L)
    x_hat = x_hat_pad[:R].reshape(B, L, M, N)              # (B, L, M, N)
    return y, x_hat


def spc_reference(x, H):
    """Pure-JAX f32 reference matching the PyTorch module (pinv=False, real='True')."""
    B, L, M, N = x.shape
    x_flat = x.reshape(B, L, M * N)
    hi = lax.Precision.HIGHEST
    y = jnp.einsum('sk,blk->bsl', H, x_flat, precision=hi)          # (B, S, L)
    xb = jnp.einsum('ks,bsl->bkl', H.T, y, precision=hi)            # (B, MN, L)
    xb = jnp.transpose(xb, (0, 2, 1)).reshape(B, L, M, N)
    xb = xb / jnp.max(xb)
    return y, xb


if __name__ == "__main__":
    # Small, SPC-consistent shapes: B=2 images, L=4 spectral channels,
    # 16x16 spatial (M*N = 256), S = 32 measurements.
    B, L = 2, 4
    M_, N_ = 16, 16
    S = 32

    key = jax.random.PRNGKey(0)
    k_h, k_x = jax.random.split(key)
    # Deterministic stand-in for torch.randn(num_measurements, M*N)
    H = jax.random.normal(k_h, (S, M_ * N_), dtype=jnp.float32)
    x = jax.random.normal(k_x, (B, L, M_, N_), dtype=jnp.float32)

    y, x_hat = spc_forward(x, H)
    jax.block_until_ready((y, x_hat))

    y_ref, x_hat_ref = spc_reference(x, H)
    # bf16 MXU inputs with f32 accumulation -> relaxed tolerances vs f32 reference.
    np.testing.assert_allclose(np.asarray(y), np.asarray(y_ref), rtol=3e-2, atol=5e-1)
    np.testing.assert_allclose(np.asarray(x_hat), np.asarray(x_hat_ref), rtol=3e-2, atol=3e-2)

    # TODO(synk): pinv=True branch (torch.pinverse) and the BinaryQuantize_1
    # (real='False') path are not exercised by the default forward and are not
    # implemented in-kernel.
    print("KERNEL_OK")
</pallas_src>

<mosaic_0001>
module attributes {stable_mosaic.version = 11 : i64} {
  func.func @_spc_measure_kernel(%arg0: i32, %arg1: memref<8x256xf32, #tpu.memory_space<vmem>>, %arg2: memref<32x256xbf16, #tpu.memory_space<vmem>>, %arg3: memref<8x32xf32, #tpu.memory_space<vmem>>, %arg4: memref<8x128xf32, #tpu.memory_space<vmem>>) attributes {dimension_semantics = [#tpu.dimension_semantics<parallel>], iteration_bounds = array<i64: 1>, scalar_prefetch = 0 : i64, scratch_operands = 0 : i64, tpu.core_type = #tpu.core_type<tc>, window_params = [{transform_indices = @transform_0, window_bounds = array<i64: 8, 256>}, {pipeline_mode = #tpu.pipeline_mode<synchronous>, transform_indices = @transform_1, window_bounds = array<i64: 32, 256>}, {transform_indices = @transform_2, window_bounds = array<i64: 8, 32>}, {transform_indices = @transform_3, window_bounds = array<i64: 8, 128>}]} {
    %c0 = arith.constant 0 : index
    %c0_0 = arith.constant 0 : index
    %0 = vector.load %arg1[%c0, %c0_0] : memref<8x256xf32, #tpu.memory_space<vmem>>, vector<8x256xf32>
    %1 = arith.truncf %0 : vector<8x256xf32> to vector<8x256xbf16>
    %c0_1 = arith.constant 0 : index
    %c0_2 = arith.constant 0 : index
    %2 = vector.load %arg2[%c0_1, %c0_2] : memref<32x256xbf16, #tpu.memory_space<vmem>>, vector<32x256xbf16>
    %cst = arith.constant dense<0.000000e+00> : vector<8x32xf32>
    %3 = tpu.matmul %1, %2, %cst {dimension_numbers = #tpu.dot_dimension_numbers<[1], [1], [0], [0], [0, 0, 1, 0], [], []>} : vector<8x256xbf16>, vector<32x256xbf16>, vector<8x32xf32> -> vector<8x32xf32>
    %c0_3 = arith.constant 0 : index
    %c0_4 = arith.constant 0 : index
    %4 = vector.load %arg3[%c0_3, %c0_4] : memref<8x32xf32, #tpu.memory_space<vmem>>, vector<8x32xf32>
    tpu.vector_store %arg3[%c0_3, %c0_4], %3 {strides = array<i32>} : memref<8x32xf32, #tpu.memory_space<vmem>>, vector<8x32xf32>,
    %5 = arith.truncf %3 : vector<8x32xf32> to vector<8x32xbf16>
    %cst_5 = arith.constant dense<0.000000e+00> : vector<8x256xf32>
    %6 = tpu.matmul %5, %2, %cst_5 {dimension_numbers = #tpu.dot_dimension_numbers<[1], [0], [0], [1], [0, 0, 1, 1], [], []>} : vector<8x32xbf16>, vector<32x256xbf16>, vector<8x256xf32> -> vector<8x256xf32>
    %7 = vector.shape_cast %6 : vector<8x256xf32> to vector<1x8x256xf32>
    %cst_6 = arith.constant dense<0xFF800000> : vector<1xf32>
    %8 = vector.multi_reduction <maximumf>, %7, %cst_6 [1, 2] : vector<1x8x256xf32> to vector<1xf32>
    %9 = vector.shape_cast %8 : vector<1xf32> to vector<1x1x1xf32>
    %10 = vector.extract %9[0, 0, 0] : f32 from vector<1x1x1xf32>
    %11 = vector.broadcast %10 : f32 to vector<8x128xf32>
    %c0_7 = arith.constant 0 : index
    %c0_8 = arith.constant 0 : index
    %12 = vector.load %arg4[%c0_7, %c0_8] : memref<8x128xf32, #tpu.memory_space<vmem>>, vector<8x128xf32>
    tpu.vector_store %arg4[%c0_7, %c0_8], %11 {strides = array<i32>} : memref<8x128xf32, #tpu.memory_space<vmem>>, vector<8x128xf32>,
    return
  }
  func.func @transform_0(%arg0: i32) -> (i32, i32) {
    %c0_i32 = arith.constant 0 : i32
    %c0_i32_0 = arith.constant 0 : i32
    return %arg0, %c0_i32 : i32, i32
  }
  func.func @transform_1(%arg0: i32) -> (i32, i32) {
    %c0_i32 = arith.constant 0 : i32
    %c0_i32_0 = arith.constant 0 : i32
    %c0_i32_1 = arith.constant 0 : i32
    return %c0_i32, %c0_i32_0 : i32, i32
  }
  func.func @transform_2(%arg0: i32) -> (i32, i32) {
    %c0_i32 = arith.constant 0 : i32
    %c0_i32_0 = arith.constant 0 : i32
    return %arg0, %c0_i32 : i32, i32
  }
  func.func @transform_3(%arg0: i32) -> (i32, i32) {
    %c0_i32 = arith.constant 0 : i32
    %c0_i32_0 = arith.constant 0 : i32
    return %arg0, %c0_i32 : i32, i32
  }
}

</mosaic_0001>

<llo_original>
// kernel: tpu_custom_call.1
$region0: #{tpu_custom_call.1}
  #allocation0 [shape = 'u32[]', space=smem, size = 0x4, offset = 0x4, fixed_abs, tag = 'smem constant byte address 0x4 - core index']
  #allocation1 [shape = 'u32[72,128]{1,0:T(1,128)}', space=vmem, size = 0x9000, scoped, tag = 'internal scratch']
  %s0 = inlined_call_operand.hbm [shape: f32[8,256], index: 0, kind: input, shape index: {}]
  %s1 = inlined_call_operand.hbm [shape: bf16[32,256], index: 1, kind: input, shape index: {}]
  %s2 = inlined_call_operand.hbm [shape: f32[8,32], index: 2, kind: output, shape index: {0}]
  %s3 = inlined_call_operand.hbm [shape: f32[8,128], index: 3, kind: output, shape index: {1}]
  %4 = xla_tuple %s2, %s3
  %s5 = sld [smem:[#allocation0]]
  $region34: #{tpu_custom_call.1} parent=0
    _
  %s7 = ssub.s32 1, %s5
  %s8 = scalar_select 0, %s7, %s5
  $region1: #{tpu_custom_call.1} parent=0
    #allocation2 [shape = 'u8[8192]{0}', space=vmem, size = 0x2000, scoped, tag = 'input window, operand 0, single buffered']
    #allocation3 [shape = 's32[1]{0}', space=sflag, size = 0x4, scoped, tag = 'scoped memory for tpu_custom_call.1']
    #allocation4 [shape = 's32[1]{0}', space=sflag, size = 0x4, scoped, tag = 'scoped memory for tpu_custom_call.1']
    #allocation5 [shape = 'u8[16384]{0}', space=vmem, size = 0x4000, scoped, tag = 'input window, operand 1, single buffered']
    #allocation6 [shape = 's32[1]{0}', space=sflag, size = 0x4, scoped, tag = 'scoped memory for tpu_custom_call.1']
    #allocation7 [shape = 'u8[4096]{0}', space=vmem, size = 0x1000, scoped, tag = 'output window, operand 0, single buffered']
    #allocation8 [shape = 'u8[4096]{0}', space=vmem, size = 0x1000, scoped, tag = 'output window, operand 1, single buffered']
    #allocation9 [shape = 's32[1]{0}', space=sflag, size = 0x4, scoped, tag = 'scoped memory for tpu_custom_call.1']
    %9 = vsyncpa [#allocation3], 0
    %10 = vsyncpa [#allocation6], 0
    %11 = vsyncpa [#allocation4], 0
    %12 = vsyncpa [#allocation9], 0
    // Predicated region
    $region2: #{tpu_custom_call.1} parent=1 // pred_check
      _
    $region3: #{tpu_custom_call.1} parent=1 // pred_check_branch
      %14 = sbr.rel (0) target = $region5
    $region4: #{tpu_custom_call.1} parent=1 // pred_region
      %16 = vsyncadd [#allocation3], 0
      %s18 = sshll.u32 %s0, 4
      %s19 = int_to_ptr.hbm [resolvable:$true] %s18
      %s20 = sshll.u32 [#allocation2], 4
      %s21 = int_to_ptr.vmem [resolvable:$true] %s20
      %23 = dma.hbm_to_vmem [thread:$0]  %s19, 256, %s21, [#allocation3]
    $region5: #{tpu_custom_call.1} parent=1 // pred_fallthru
      _
    // Predicated region
    $region6: #{tpu_custom_call.1} parent=1 // pred_check
      _
    $region7: #{tpu_custom_call.1} parent=1 // pred_check_branch
      %25 = sbr.rel (0) target = $region9
    $region8: #{tpu_custom_call.1} parent=1 // pred_region
      %27 = vsyncadd [#allocation6], 0
      %s28 = sshll.u32 %s1, 4
      %s29 = int_to_ptr.hbm [resolvable:$true] %s28
      %s30 = sshll.u32 [#allocation5], 4
      %s31 = int_to_ptr.vmem [resolvable:$true] %s30
      %36 = dma.hbm_to_vmem [thread:$0]  %s29, 512, %s31, [#allocation6], 128, 128, 8
    $region9: #{tpu_custom_call.1} parent=1 // pred_fallthru
      _
    // Predicated region
    $region10: #{tpu_custom_call.1} parent=1 // pred_check
      _
    $region11: #{tpu_custom_call.1} parent=1 // pred_check_branch
      %38 = sbr.rel (0) target = $region13
    $region12: #{tpu_custom_call.1} parent=1 // pred_region
      %40 = dma.done [#allocation3], 256
    $region13: #{tpu_custom_call.1} parent=1 // pred_fallthru
      _
    // Predicated region
    $region14: #{tpu_custom_call.1} parent=1 // pred_check
      _
    $region15: #{tpu_custom_call.1} parent=1 // pred_check_branch
      %42 = sbr.rel (0) target = $region17
    $region16: #{tpu_custom_call.1} parent=1 // pred_region
      %44 = dma.done [#allocation6], 512
    $region17: #{tpu_custom_call.1} parent=1 // pred_fallthru
      _
    %v46 = vld [vmem:[#allocation2] sm:$0xff]
    %v47 = vld [vmem:[#allocation2 + $0x8] sm:$0xff]
    %v48 = vpack.c.bf16 %v46, %v46
    %v49 = vpack.c.bf16 %v47, %v47
    %v50 = vld [vmem:[#allocation5] sm:$0xff]
    %v51 = vld [vmem:[#allocation5 + $0x8] sm:$0xff]
    %v52 = vld [vmem:[#allocation5 + $0x10] sm:$0xff]
    %v53 = vld [vmem:[#allocation5 + $0x18] sm:$0xff]
    %v58 = vunpack.c.l.b16 %v50
    %v59 = vunpack.c.h.b16 %v50
    %v60 = vunpack.c.l.b16 %v51
    %v61 = vunpack.c.h.b16 %v51
    %v62 = vunpack.c.l.b16 %v52
    %v63 = vunpack.c.h.b16 %v52
    %v64 = vunpack.c.l.b16 %v53
    %v65 = vunpack.c.h.b16 %v53
    %v66 = vpack.c.b16 %v60, %v58
    %v67 = vpack.c.b16 %v61, %v59
    %v68 = vpack.c.b16 %v64, %v62
    %v69 = vpack.c.b16 %v65, %v63
    %74 = vmatpush.bf16.xpose.msra.mxu0 0
    %75 = vmatpush.bf16.xpose.msra.mxu0 0
    %76 = vmatpush.bf16.xpose.msra.mxu0 0
    %77 = vmatpush.bf16.xpose.msra.mxu0 0
    %78 = vmatpush.bf16.xpose.msra.mxu0 0
    %79 = vmatpush.bf16.xpose.msra.mxu0 0
    %80 = vmatpush.bf16.xpose.msra.mxu0 %v68
    %81 = vmatpush.bf16.xpose.msra.mxu0 %v66
    %82 = vmatmul.bf16.gmra.mxu0 %v48
    %v83 = vpop.f32.mrf.mxu0
    %v84 = vadd.f32 0.0, %v83
    %v85 = vpop.f32.mrf.mxu0
    %86 = vdwg.mxu0
    %87 = vmatpush.bf16.xpose.msra.mxu0 0
    %88 = vmatpush.bf16.xpose.msra.mxu0 0
    %89 = vmatpush.bf16.xpose.msra.mxu0 0
    %90 = vmatpush.bf16.xpose.msra.mxu0 0
    %91 = vmatpush.bf16.xpose.msra.mxu0 0
    %92 = vmatpush.bf16.xpose.msra.mxu0 0
    %93 = vmatpush.bf16.xpose.msra.mxu0 %v69
    %94 = vmatpush.bf16.xpose.msra.mxu0 %v67
    %95 = vmatmul.bf16.gmra.mxu0 %v49
    %v96 = vpop.f32.mrf.mxu0
    %v97 = vadd.f32 %v84, %v96
    %v98 = vpop.f32.mrf.mxu0
    %99 = vdwg.mxu0
    %vm100 = vcmask 261120
    %101 = vst.msk [vmem:[#allocation7] sm:$0xff] %vm100, %v97
    %v102 = vpack.c.bf16 %v97, %v97
    %v104 = vsel %vm100, %v102, 0
    %106 = vmatpush.bf16.msra.mxu0 0
    %107 = vmatpush.bf16.msra.mxu0 0
    %108 = vmatpush.bf16.msra.mxu0 0
    %109 = vmatpush.bf16.msra.mxu0 0
    %110 = vmatpush.bf16.msra.mxu0 0
    %111 = vmatpush.bf16.msra.mxu0 0
    %112 = vmatpush.bf16.msra.mxu0 %v68
    %113 = vmatpush.bf16.msra.mxu0 %v66
    %114 = vmatmul.bf16.gmra.mxu0 %v104
    %v115 = vpop.f32.mrf.mxu0
    %v116 = vadd.f32 0.0, %v115
    %v117 = vpop.f32.mrf.mxu0
    %118 = vdwg.mxu0
    %119 = vmatpush.bf16.msra.mxu0 0
    %120 = vmatpush.bf16.msra.mxu0 0
    %121 = vmatpush.bf16.msra.mxu0 0
    %122 = vmatpush.bf16.msra.mxu0 0
    %123 = vmatpush.bf16.msra.mxu0 0
    %124 = vmatpush.bf16.msra.mxu0 0
    %125 = vmatpush.bf16.msra.mxu0 %v69
    %126 = vmatpush.bf16.msra.mxu0 %v67
    %127 = vmatmul.bf16.gmra.mxu0 %v104
    %v128 = vpop.f32.mrf.mxu0
    %v129 = vadd.f32 0.0, %v128
    %v130 = vpop.f32.mrf.mxu0
    %131 = vdwg.mxu0
    %v132 = vmax.f32 %v116, %v129
    %133 = vmax.xlane.f32.xlu0 %v132
    %v134 = vpop.xlane.xlu0 %133
    %v135 = vrot.slane %v134, 4
    %v136 = vmax.f32 %v134, %v135
    %v137 = vrot.slane %v136, 2
    %v138 = vmax.f32 %v136, %v137
    %v139 = vrot.slane %v138, 1
    %v140 = vmax.f32 %v138, %v139
    %s141 = vtos %v140
    %v142 = vstv %s141
    %143 = vst [vmem:[#allocation8] sm:$0xff] %v142
    // Predicated region
    $region18: #{tpu_custom_call.1} parent=1 // pred_check
      _
    $region19: #{tpu_custom_call.1} parent=1 // pred_check_branch
      %145 = sbr.rel (0) target = $region21
    $region20: #{tpu_custom_call.1} parent=1 // pred_region
      %147 = vsyncadd [#allocation4], 0
      %s149 = sshll.u32 [#allocation7], 4
      %s150 = int_to_ptr.vmem [resolvable:$true] %s149
      %s151 = sshll.u32 %s2, 4
      %s152 = int_to_ptr.hbm [resolvable:$true] %s151
      %154 = dma.vmem_to_hbm [thread:$0]  %s150, 128, %s152, [#allocation4]
    $region21: #{tpu_custom_call.1} parent=1 // pred_fallthru
      _
    // Predicated region
    $region22: #{tpu_custom_call.1} parent=1 // pred_check
      _
    $region23: #{tpu_custom_call.1} parent=1 // pred_check_branch
      %156 = sbr.rel (0) target = $region25
    $region24: #{tpu_custom_call.1} parent=1 // pred_region
      %158 = vsyncadd [#allocation9], 0
      %s160 = sshll.u32 [#allocation8], 4
      %s161 = int_to_ptr.vmem [resolvable:$true] %s160
      %s162 = sshll.u32 %s3, 4
      %s163 = int_to_ptr.hbm [resolvable:$true] %s162
      %165 = dma.vmem_to_hbm [thread:$0]  %s161, 128, %s163, [#allocation9]
    $region25: #{tpu_custom_call.1} parent=1 // pred_fallthru
      _
    // Predicated region
    $region26: #{tpu_custom_call.1} parent=1 // pred_check
      _
    $region27: #{tpu_custom_call.1} parent=1 // pred_check_branch
      %167 = sbr.rel (0) target = $region29
    $region28: #{tpu_custom_call.1} parent=1 // pred_region
      %169 = dma.done [#allocation4], 128
    $region29: #{tpu_custom_call.1} parent=1 // pred_fallthru
      _
    // Predicated region
    $region30: #{tpu_custom_call.1} parent=1 // pred_check
      _
    $region31: #{tpu_custom_call.1} parent=1 // pred_check_branch
      %171 = sbr.rel (0) target = $region33
    $region32: #{tpu_custom_call.1} parent=1 // pred_region
      %173 = dma.done [#allocation9], 128
    $region33: #{tpu_custom_call.1} parent=1 // pred_fallthru
      _
    %174 = vsyncpa [#allocation3], 1
    %175 = vsyncpa [#allocation6], 1
    %176 = vsyncpa [#allocation4], 1
    %177 = vsyncpa [#allocation9], 1

</llo_original>
